<compile_context>
chip_gen: v6e
topology: v6e:2x2x1
jax: 0.10.0
libtpu: 0.0.40
codegen_flags: <defaults>
</compile_context>

<pallas_src>
import math
import functools

import jax
import jax.numpy as jnp
from jax.experimental import pallas as pl
from jax.experimental.pallas import tpu as pltpu

VOCAB_SIZE = 54
EMBED_DIM = 512
PAD_IDX = 53
TOKEN_TILE = 1024   # tokens per grid step; sweep 512-2048 for peak throughput
VOCAB_PAD = 64      # pad table rows to 64 for clean sublane layout


def _round_up(x, m):
    return ((x + m - 1) // m) * m


def _embed_kernel(ids_ref, table_ref, out_ref, *, scale):
    # ids_ref: (TM, 1) int32 ; table_ref: (Vp, D) f32 ; out_ref: (TM, D) f32
    ids = ids_ref[...]                                              # (TM, 1)
    tm = ids.shape[0]
    vocab = table_ref.shape[0]
    lane_ids = jax.lax.broadcasted_iota(jnp.int32, (tm, vocab), 1)
    # Fold sqrt(D) into the one-hot: a (TM, Vp) constant select instead of a
    # (TM, D) VPU multiply after the matmul.
    onehot = jnp.where(lane_ids == ids, scale, 0.0).astype(table_ref.dtype)
    out_ref[...] = jnp.dot(
        onehot, table_ref[...],
        preferred_element_type=jnp.float32,
    ).astype(out_ref.dtype)


def jamo_embedding(ids, table, *, embedding_dim=EMBED_DIM, token_tile=TOKEN_TILE):
    """ids: int32 (B, S); table: f32 (V, D). Returns f32 (B, S, D)."""
    b, s = ids.shape
    v, d = table.shape
    n = b * s

    # Adaptive tile: large tiles for real workloads, shrink (sublane-aligned)
    # for tiny inputs so we don't run 1024-token steps over 16 real tokens.
    tm = min(token_tile, _round_up(n, 8))
    # Even number of grid steps -> balanced split across v7x's 2 TensorCores.
    n_pad = _round_up(n, 2 * tm)

    flat_ids = ids.reshape(n).astype(jnp.int32)
    # Pad with PAD_IDX (a zero row) — padded rows are sliced off below.
    flat_ids = jnp.pad(flat_ids, (0, n_pad - n), constant_values=PAD_IDX)
    # NOTE: the (TM, 1) ids block is lane-padded to 128 in VMEM (~0.5 MiB per
    # buffer at TM=1024); this is accounted for in the VMEM budget above.
    flat_ids = flat_ids.reshape(n_pad, 1)

    # Pad vocab rows with zeros (never indexed by real ids; layout-only).
    v_pad = max(VOCAB_PAD, _round_up(v, 8))
    table_p = jnp.pad(table, ((0, v_pad - v), (0, 0)))

    scale = math.sqrt(embedding_dim)
    kernel = functools.partial(_embed_kernel, scale=scale)

    out = pl.pallas_call(
        kernel,
        out_shape=jax.ShapeDtypeStruct((n_pad, d), table.dtype),
        grid_spec=pltpu.PrefetchScalarGridSpec(
            num_scalar_prefetch=0,
            grid=(n_pad // tm,),
            in_specs=[
                pl.BlockSpec((tm, 1), lambda i: (i, 0)),       # ids tile
                pl.BlockSpec((v_pad, d), lambda i: (0, 0)),    # resident table
            ],
            out_specs=pl.BlockSpec((tm, d), lambda i: (i, 0)),
        ),
        compiler_params=pltpu.CompilerParams(
            dimension_semantics=("parallel",),
            vmem_limit_bytes=32 * 1024 * 1024,
        ),
    )(flat_ids, table_p)

    return out[:n].reshape(b, s, d)


if __name__ == "__main__":
    key = jax.random.PRNGKey(0)
    k_tab, k_ids = jax.random.split(key)

    # Deterministic parameter init (nn.Embedding: N(0,1), padding row zeroed).
    table = jax.random.normal(k_tab, (VOCAB_SIZE, EMBED_DIM), dtype=jnp.float32)
    table = table.at[PAD_IDX].set(0.0)

    # Small example input: batch=2, seq=8 token ids (include pad tokens).
    B, S = 2, 8
    ids = jax.random.randint(k_ids, (B, S), 0, VOCAB_SIZE, dtype=jnp.int32)
    ids = ids.at[0, -1].set(PAD_IDX)

    out = jamo_embedding(ids, table)
    out = jax.block_until_ready(out)

    # Reference check (plain JAX gather).
    ref = jnp.take(table, ids, axis=0) * math.sqrt(EMBED_DIM)
    assert out.shape == (B, S, EMBED_DIM), out.shape
    assert jnp.allclose(out, ref, atol=1e-5, rtol=1e-5), "mismatch vs reference"
    assert jnp.allclose(out[0, -1], 0.0), "pad row must be zero"

    print("KERNEL_OK")
</pallas_src>

<mosaic_0001>
module attributes {stable_mosaic.version = 11 : i64} {
  func.func @_embed_kernel(%arg0: i32, %arg1: memref<16x1xi32, #tpu.memory_space<vmem>>, %arg2: memref<64x512xf32, #tpu.memory_space<vmem>>, %arg3: memref<16x512xf32, #tpu.memory_space<vmem>>) attributes {dimension_semantics = [#tpu.dimension_semantics<parallel>], iteration_bounds = array<i64: 2>, scalar_prefetch = 0 : i64, scratch_operands = 0 : i64, tpu.core_type = #tpu.core_type<tc>, window_params = [{transform_indices = @transform_0, window_bounds = array<i64: 16, 1>}, {pipeline_mode = #tpu.pipeline_mode<synchronous>, transform_indices = @transform_1, window_bounds = array<i64: 64, 512>}, {transform_indices = @transform_2, window_bounds = array<i64: 16, 512>}]} {
    %c0 = arith.constant 0 : index
    %c0_0 = arith.constant 0 : index
    %0 = vector.load %arg1[%c0, %c0_0] : memref<16x1xi32, #tpu.memory_space<vmem>>, vector<16x1xi32>
    %1 = tpu.iota {dimensions = array<i32: 1>} : vector<16x64xi32>
    %2 = vector.broadcast %0 : vector<16x1xi32> to vector<16x64xi32>
    %3 = arith.cmpi eq, %1, %2 : vector<16x64xi32>
    %cst = arith.constant 22.6274166 : f32
    %cst_1 = arith.constant 0.000000e+00 : f32
    %4 = vector.broadcast %cst : f32 to vector<16x64xf32>
    %5 = vector.broadcast %cst_1 : f32 to vector<16x64xf32>
    %6 = arith.select %3, %4, %5 : vector<16x64xi1>, vector<16x64xf32>
    %c0_2 = arith.constant 0 : index
    %c0_3 = arith.constant 0 : index
    %7 = vector.load %arg2[%c0_2, %c0_3] : memref<64x512xf32, #tpu.memory_space<vmem>>, vector<64x512xf32>
    %cst_4 = arith.constant dense<0.000000e+00> : vector<16x512xf32>
    %8 = tpu.matmul %6, %7, %cst_4 {dimension_numbers = #tpu.dot_dimension_numbers<[1], [0], [0], [1], [0, 0, 1, 1], [], []>} : vector<16x64xf32>, vector<64x512xf32>, vector<16x512xf32> -> vector<16x512xf32>
    %c0_5 = arith.constant 0 : index
    %c0_6 = arith.constant 0 : index
    %9 = vector.load %arg3[%c0_5, %c0_6] : memref<16x512xf32, #tpu.memory_space<vmem>>, vector<16x512xf32>
    tpu.vector_store %arg3[%c0_5, %c0_6], %8 {strides = array<i32>} : memref<16x512xf32, #tpu.memory_space<vmem>>, vector<16x512xf32>,
    return
  }
  func.func @transform_0(%arg0: i32) -> (i32, i32) {
    %c0_i32 = arith.constant 0 : i32
    %c0_i32_0 = arith.constant 0 : i32
    return %arg0, %c0_i32 : i32, i32
  }
  func.func @transform_1(%arg0: i32) -> (i32, i32) {
    %c0_i32 = arith.constant 0 : i32
    %c0_i32_0 = arith.constant 0 : i32
    %c0_i32_1 = arith.constant 0 : i32
    return %c0_i32, %c0_i32_0 : i32, i32
  }
  func.func @transform_2(%arg0: i32) -> (i32, i32) {
    %c0_i32 = arith.constant 0 : i32
    %c0_i32_0 = arith.constant 0 : i32
    return %arg0, %c0_i32 : i32, i32
  }
}

</mosaic_0001>

<llo_original>
// kernel: tpu_custom_call.1
$region0: #{tpu_custom_call.1}
  #allocation0 [shape = 'u32[]', space=smem, size = 0x4, offset = 0x4, fixed_abs, tag = 'smem constant byte address 0x4 - core index']
  #allocation1 [shape = 'u32[144,128]{1,0:T(1,128)}', space=vmem, size = 0x12000, scoped, tag = 'internal scratch']
  %s0 = inlined_call_operand.vmem [shape: s32[32,1], index: 0, kind: input, shape index: {}]
  %s1 = inlined_call_operand.hbm [shape: f32[64,512], index: 1, kind: input, shape index: {}]
  %s2 = inlined_call_operand.hbm [shape: f32[32,512], index: 2, kind: output, shape index: {}]
  %s3 = sld [smem:[#allocation0]]
  $region45: #{tpu_custom_call.1} parent=0
    _
  %s5 = ssub.s32 1, %s3
  %s6 = scalar_select 0, %s5, %s3
  $region1: #{tpu_custom_call.1} parent=0
    #allocation2 [shape = 'u8[131072]{0}', space=vmem, size = 0x20000, scoped, tag = 'input window, operand 1, single buffered']
    #allocation3 [shape = 's32[2]{0}', space=sflag, size = 0x8, scoped, tag = 'scoped memory for tpu_custom_call.1']
    #allocation4 [shape = 's32[2]{0}', space=sflag, size = 0x8, scoped, tag = 'scoped memory for tpu_custom_call.1']
    #allocation5 [shape = 'u8[65536]{0}', space=vmem, size = 0x10000, scoped, tag = 'output window, operand 0']
    %7 = vsyncpa [#allocation3], 0
    %8 = vsyncpa [#allocation4], 0
    %s9 = scalar_lea.sflag [#allocation4], 1
    %10 = vsyncpa %s9, 0
    loop: start=0, step=1, limit=4
    $region2: #{tpu_custom_call.1} parent=1 // loop_pre_header
      _
    $region3: #{tpu_custom_call.1} parent=1 // loop_header
      %s12 = sphi 0, %s16
      %p13 = scmp.ge.s32.totalorder %s12, 4
      %s22 = sphi 0, %s24
      %s25 = sphi 0, %s22
      %s26 = sphi 0, %s25
      %s42 = sphi 0, %s26
      %s46 = sphi 0, %s46
      %s48 = sphi 0, %s46
      %s49 = sphi 0, %s48
      %s63 = sphi 0, %s49
      %s69 = sphi 0, %s71
      %s72 = sphi 0, %s69
      %s73 = sphi 0, %s72
      %s89 = sphi 0, %s73
    $region4: #{tpu_custom_call.1} parent=1 // loop_header_branch
      %15 = sbr.rel (%p13) target = $region8
    $region5: #{tpu_custom_call.1} parent=1 // loop_body
      %s17 = ssub.s32 %s12, 1
      %s18 = ssub.s32 %s12, 2
      %s19 = sadd.s32 %s12, 1
      %s20 = ssub.s32 %s12, %s19
      %p21 = scmp.eq.s32.totalorder %s20, 0
      %s23 = sadd.s32 %s22, 1
      %s24 = scalar_select %p21, %s22, %s23
      %p27 = pneg %p21
      %p28 = scmp.eq.s32.totalorder %s12, 1
      %p29 = por %p27, %p28
      %p30 = scmp.ne.s32.totalorder %s22, %s25
      %p31 = scmp.eq.s32.totalorder %s12, 0
      %p32 = por %p30, %p31
      %p33 = scmp.ne.s32.totalorder %s22, %s25
      %p34 = scmp.eq.s32.totalorder %s17, 1
      %p35 = por %p33, %p34
      %p36 = scmp.ne.s32.totalorder %s25, %s26
      %p37 = scmp.eq.s32.totalorder %s17, 0
      %p38 = por %p36, %p37
      %p39 = scmp.ne.s32.totalorder %s25, %s26
      %p40 = scmp.eq.s32.totalorder %s18, 1
      %p41 = por %p39, %p40
      %p43 = scmp.ne.s32.totalorder %s26, %s42
      %p44 = scmp.eq.s32.totalorder %s18, 0
      %p45 = por %p43, %p44
      %s47 = sadd.s32 %s46, 1
      %p50 = scmp.eq.s32.totalorder %s12, 1
      %p51 = scmp.ne.s32.totalorder %s46, %s48
      %p52 = scmp.eq.s32.totalorder %s12, 0
      %p53 = por %p51, %p52
      %p54 = scmp.ne.s32.totalorder %s46, %s48
      %p55 = scmp.eq.s32.totalorder %s17, 1
      %p56 = por %p54, %p55
      %p57 = scmp.ne.s32.totalorder %s48, %s49
      %p58 = scmp.eq.s32.totalorder %s17, 0
      %p59 = por %p57, %p58
      %p60 = scmp.ne.s32.totalorder %s48, %s49
      %p61 = scmp.eq.s32.totalorder %s18, 1
      %p62 = por %p60, %p61
      %p64 = scmp.ne.s32.totalorder %s49, %s63
      %p65 = scmp.eq.s32.totalorder %s18, 0
      %p66 = por %p64, %p65
      %s67 = ssub.s32 %s12, %s19
      %p68 = scmp.eq.s32.totalorder %s67, 0
      %s70 = sadd.s32 %s69, 1
      %s71 = scalar_select %p68, %s69, %s70
      %p74 = pneg %p68
      %p75 = scmp.eq.s32.totalorder %s12, 1
      %p76 = por %p74, %p75
      %p77 = scmp.ne.s32.totalorder %s69, %s72
      %p78 = scmp.eq.s32.totalorder %s12, 0
      %p79 = por %p77, %p78
      %p80 = scmp.ne.s32.totalorder %s69, %s72
      %p81 = scmp.eq.s32.totalorder %s17, 1
      %p82 = por %p80, %p81
      %p83 = scmp.ne.s32.totalorder %s72, %s73
      %p84 = scmp.eq.s32.totalorder %s17, 0
      %p85 = por %p83, %p84
      %p86 = scmp.ne.s32.totalorder %s72, %s73
      %p87 = scmp.eq.s32.totalorder %s18, 1
      %p88 = por %p86, %p87
      %p90 = scmp.ne.s32.totalorder %s73, %s89
      %p91 = scmp.eq.s32.totalorder %s18, 0
      %p92 = por %p90, %p91
      %p93 = scmp.le.s32.totalorder 1, %s12
      %p94 = scmp.lt.s32.totalorder %s12, 3
      %p95 = pnand %p93, %p94
      %p96 = pneg %p95
      // Predicated region
      $region9: #{tpu_custom_call.1} parent=5 // pred_check
        _
      $region10: #{tpu_custom_call.1} parent=5 // pred_check_branch
        %98 = sbr.rel (%p95) target = $region12
      $region11: #{tpu_custom_call.1} parent=5 // pred_region
        %s99 = ssub.s32 %s12, 1
        // Predicated region
        $region13: #{tpu_custom_call.1} parent=11 // pred_check
          %p100 = pneg %p59
        $region14: #{tpu_custom_call.1} parent=11 // pred_check_branch
          %102 = sbr.rel (%p100) target = $region16
        $region15: #{tpu_custom_call.1} parent=11 // pred_region
          %s104 = ssub.s32 4096, 4096
          %105 = vsyncadd [#allocation3], %s104
          %s106 = sshll.u32 [#allocation2], 4
          %s107 = int_to_ptr.vmem [resolvable:$true] %s106
          %112 = dma.hbm_to_vmem [thread:$0]  %s1, 4096, %s107, [#allocation3], 512, 512, 32
        $region16: #{tpu_custom_call.1} parent=11 // pred_fallthru
          _
      $region12: #{tpu_custom_call.1} parent=5 // pred_fallthru
        _
      %p113 = scmp.lt.s32.totalorder %s12, 2
      // Predicated region
      $region17: #{tpu_custom_call.1} parent=5 // pred_check
        %p114 = pneg %p113
      $region18: #{tpu_custom_call.1} parent=5 // pred_check_branch
        %116 = sbr.rel (%p114) target = $region20
      $region19: #{tpu_custom_call.1} parent=5 // pred_region
        // Predicated region
        $region21: #{tpu_custom_call.1} parent=19 // pred_check
          %p117 = pneg %p32
        $region22: #{tpu_custom_call.1} parent=19 // pred_check_branch
          %119 = sbr.rel (%p117) target = $region24
        $region23: #{tpu_custom_call.1} parent=19 // pred_region
          %s120 = smul.u32 2, %s12
          %p121 = scmp.lt.s32.totalorder %s120, 3
          %s122 = scalar_select %p121, %s120, 3
          %s123 = smul.addr %s122, 8
          %s124 = scalar_lea.vmem %s0, %s123
          %s125 = smul.u32 2, %s12
        $region24: #{tpu_custom_call.1} parent=19 // pred_fallthru
          _
      $region20: #{tpu_custom_call.1} parent=5 // pred_fallthru
        _
      %p126 = scmp.le.s32.totalorder 1, %s12
      %p127 = scmp.lt.s32.totalorder %s12, 3
      %p128 = pnand %p126, %p127
      %p129 = pneg %p128
      // Predicated region
      $region25: #{tpu_custom_call.1} parent=5 // pred_check
        _
      $region26: #{tpu_custom_call.1} parent=5 // pred_check_branch
        %131 = sbr.rel (%p128) target = $region28
      $region27: #{tpu_custom_call.1} parent=5 // pred_region
        %s132 = ssub.s32 %s12, 1
        // Predicated region
        $region29: #{tpu_custom_call.1} parent=27 // pred_check
          %p133 = pneg %p59
        $region30: #{tpu_custom_call.1} parent=27 // pred_check_branch
          %135 = sbr.rel (%p133) target = $region32
        $region31: #{tpu_custom_call.1} parent=27 // pred_region
          %136 = dma.done [#allocation3], 4096
        $region32: #{tpu_custom_call.1} parent=27 // pred_fallthru
          _
        %s137 = smul.u32 2, %s17
        %p138 = scmp.lt.s32.totalorder %s137, 3
        %s139 = scalar_select %p138, %s137, 3
        %s140 = smul.addr %s139, 8
        %s141 = scalar_lea.vmem %s0, %s140
        %p142 = pneg %p38
        %p143 = pneg %p35
        %p144 = pneg %p59
        %p145 = pneg %p56
        %p146 = pneg %p85
        %p147 = pneg %p82
        %s148 = sand.u32 %s72, 1
        %s149 = scalar_lea.sflag [#allocation4], %s148
        %s150 = sand.u32 %s72, 1
        %s151 = smul.addr %s150, 64
        %s152 = scalar_lea.vmem [#allocation5], %s151
        %s153 = smul.u32 2, %s17
        %p154 = scmp.lt.s32.totalorder %s153, 3
        %s155 = scalar_select %p154, %s153, 3
        %s156 = smul.addr %s155, 8
        %s157 = scalar_lea.vmem %s0, %s156
        %s158 = smul.u32 2, %s17
        %s159 = smul.u32 2, %s17
        %v160 = vld [vmem:[%s157] sm:$0xff]
        %v161 = vld [vmem:[%s157 + $0x8] sm:$0xff]
        %v162 = vlaneseq
        %v163 = vand.u32 %v162, 127
        %164 = vset.pattern.permute.xlu0 0
        %165 = vperm.xlu0 %164, %v160
        %v166 = vpop.permute.xlu0 %165
        %167 = vset.pattern.permute.xlu0 0
        %168 = vperm.xlu0 %167, %v161
        %v169 = vpop.permute.xlu0 %168
        %vm170 = vcmp.eq.s32.totalorder %v163, %v166
        %vm171 = vcmp.eq.s32.totalorder %v163, %v169
        %v172 = vsel %vm170, 22.627417, 0.0
        %v173 = vsel %vm171, 22.627417, 0.0
        %v174 = vld [vmem:[#allocation2] sm:$0xff]
        %v175 = vld [vmem:[#allocation2 + $0x8] sm:$0xff]
        %v176 = vld [vmem:[#allocation2 + $0x10] sm:$0xff]
        %v177 = vld [vmem:[#allocation2 + $0x18] sm:$0xff]
        %v178 = vld [vmem:[#allocation2 + $0x20] sm:$0xff]
        %v179 = vld [vmem:[#allocation2 + $0x28] sm:$0xff]
        %v180 = vld [vmem:[#allocation2 + $0x30] sm:$0xff]
        %v181 = vld [vmem:[#allocation2 + $0x38] sm:$0xff]
        %v182 = vld [vmem:[#allocation2 + $0x40] sm:$0xff]
        %v183 = vld [vmem:[#allocation2 + $0x48] sm:$0xff]
        %v184 = vld [vmem:[#allocation2 + $0x50] sm:$0xff]
        %v185 = vld [vmem:[#allocation2 + $0x58] sm:$0xff]
        %v186 = vld [vmem:[#allocation2 + $0x60] sm:$0xff]
        %v187 = vld [vmem:[#allocation2 + $0x68] sm:$0xff]
        %v188 = vld [vmem:[#allocation2 + $0x70] sm:$0xff]
        %v189 = vld [vmem:[#allocation2 + $0x78] sm:$0xff]
        %v190 = vld [vmem:[#allocation2 + $0x80] sm:$0xff]
        %v191 = vld [vmem:[#allocation2 + $0x88] sm:$0xff]
        %v192 = vld [vmem:[#allocation2 + $0x90] sm:$0xff]
        %v193 = vld [vmem:[#allocation2 + $0x98] sm:$0xff]
        %v194 = vld [vmem:[#allocation2 + $0xa0] sm:$0xff]
        %v195 = vld [vmem:[#allocation2 + $0xa8] sm:$0xff]
        %v196 = vld [vmem:[#allocation2 + $0xb0] sm:$0xff]
        %v197 = vld [vmem:[#allocation2 + $0xb8] sm:$0xff]
        %v198 = vld [vmem:[#allocation2 + $0xc0] sm:$0xff]
        %v199 = vld [vmem:[#allocation2 + $0xc8] sm:$0xff]
        %v200 = vld [vmem:[#allocation2 + $0xd0] sm:$0xff]
        %v201 = vld [vmem:[#allocation2 + $0xd8] sm:$0xff]
        %v202 = vld [vmem:[#allocation2 + $0xe0] sm:$0xff]
        %v203 = vld [vmem:[#allocation2 + $0xe8] sm:$0xff]
        %v204 = vld [vmem:[#allocation2 + $0xf0] sm:$0xff]
        %v205 = vld [vmem:[#allocation2 + $0xf8] sm:$0xff]
        %vm206 = vcmask 523264
        %v208 = vsel %vm206, %v172, 0
        %v211 = vsel %vm206, %v173, 0
        %213 = vmatprep.subr.mxu0 0.0
        %214 = vmatpush1.msra.mxu0 0.0
        %215 = vmatprep.subr.mxu0 0.0
        %216 = vmatpush1.msra.mxu0 0.0
        %217 = vmatprep.subr.mxu0 0.0
        %218 = vmatpush1.msra.mxu0 0.0
        %219 = vmatprep.subr.mxu0 0.0
        %220 = vmatpush1.msra.mxu0 0.0
        %221 = vmatprep.subr.mxu0 0.0
        %222 = vmatpush1.msra.mxu0 0.0
        %223 = vmatprep.subr.mxu0 0.0
        %224 = vmatpush1.msra.mxu0 0.0
        %225 = vmatprep.subr.mxu0 0.0
        %226 = vmatpush1.msra.mxu0 0.0
        %227 = vmatprep.subr.mxu0 0.0
        %228 = vmatpush1.msra.mxu0 0.0
        %229 = vmatprep.subr.mxu0 %v203
        %230 = vmatpush1.msra.mxu0 %v202
        %231 = vmatprep.subr.mxu0 %v199
        %232 = vmatpush1.msra.mxu0 %v198
        %233 = vmatprep.subr.mxu0 %v195
        %234 = vmatpush1.msra.mxu0 %v194
        %235 = vmatprep.subr.mxu0 %v191
        %236 = vmatpush1.msra.mxu0 %v190
        %237 = vmatprep.subr.mxu0 %v187
        %238 = vmatpush1.msra.mxu0 %v186
        %239 = vmatprep.subr.mxu0 %v183
        %240 = vmatpush1.msra.mxu0 %v182
        %241 = vmatprep.subr.mxu0 %v179
        %242 = vmatpush1.msra.mxu0 %v178
        %243 = vmatprep.subr.mxu0 %v175
        %244 = vmatpush1.msra.mxu0 %v174
        %245 = vmatprep.subr.mxu0 0.0
        %246 = vmatpush2.msra.mxu0 0.0
        %247 = vmatprep.subr.mxu0 0.0
        %248 = vmatpush2.msra.mxu0 0.0
        %249 = vmatprep.subr.mxu0 0.0
        %250 = vmatpush2.msra.mxu0 0.0
        %251 = vmatprep.subr.mxu0 0.0
        %252 = vmatpush2.msra.mxu0 0.0
        %253 = vmatprep.subr.mxu0 0.0
        %254 = vmatpush2.msra.mxu0 0.0
        %255 = vmatprep.subr.mxu0 0.0
        %256 = vmatpush2.msra.mxu0 0.0
        %257 = vmatprep.subr.mxu0 0.0
        %258 = vmatpush2.msra.mxu0 0.0
        %259 = vmatprep.subr.mxu0 0.0
        %260 = vmatpush2.msra.mxu0 0.0
        %261 = vmatprep.subr.mxu0 0.0
        %262 = vmatpush2.msra.mxu0 0.0
        %263 = vmatprep.subr.mxu0 0.0
        %264 = vmatpush2.msra.mxu0 0.0
        %265 = vmatprep.subr.mxu0 0.0
        %266 = vmatpush2.msra.mxu0 0.0
        %267 = vmatprep.subr.mxu0 0.0
        %268 = vmatpush2.msra.mxu0 0.0
        %269 = vmatprep.subr.mxu0 0.0
        %270 = vmatpush2.msra.mxu0 0.0
        %271 = vmatprep.subr.mxu0 0.0
        %272 = vmatpush2.msra.mxu0 0.0
        %273 = vmatprep.subr.mxu0 0.0
        %274 = vmatpush2.msra.mxu0 0.0
        %275 = vmatprep.subr.mxu0 0.0
        %276 = vmatpush2.msra.mxu0 0.0
        %277 = vmatprep.mubr.f32.mxu0 0.0
        %278 = vmatmul.mubr.f32.gmra.mxu0 %v208
        %v279 = vpop.f32.mrf.mxu0
        %v280 = vadd.f32 0.0, %v279
        %v281 = vpop.f32.mrf.mxu0
        %v282 = vadd.f32 0.0, %v281
        %283 = vmatprep.mubr.f32.mxu0 0.0
        %284 = vmatmul.mubr.f32.gmra.mxu0 %v211
        %v285 = vpop.f32.mrf.mxu0
        %v286 = vadd.f32 0.0, %v285
        %v287 = vpop.f32.mrf.mxu0
        %v288 = vadd.f32 0.0, %v287
        %289 = vdwg.mxu0
        %290 = vmatprep.subr.mxu0 0.0
        %291 = vmatpush1.msra.mxu0 0.0
        %292 = vmatprep.subr.mxu0 0.0
        %293 = vmatpush1.msra.mxu0 0.0
        %294 = vmatprep.subr.mxu0 0.0
        %295 = vmatpush1.msra.mxu0 0.0
        %296 = vmatprep.subr.mxu0 0.0
        %297 = vmatpush1.msra.mxu0 0.0
        %298 = vmatprep.subr.mxu0 0.0
        %299 = vmatpush1.msra.mxu0 0.0
        %300 = vmatprep.subr.mxu0 0.0
        %301 = vmatpush1.msra.mxu0 0.0
        %302 = vmatprep.subr.mxu0 0.0
        %303 = vmatpush1.msra.mxu0 0.0
        %304 = vmatprep.subr.mxu0 0.0
        %305 = vmatpush1.msra.mxu0 0.0
        %306 = vmatprep.subr.mxu0 %v205
        %307 = vmatpush1.msra.mxu0 %v204
        %308 = vmatprep.subr.mxu0 %v201
        %309 = vmatpush1.msra.mxu0 %v200
        %310 = vmatprep.subr.mxu0 %v197
        %311 = vmatpush1.msra.mxu0 %v196
        %312 = vmatprep.subr.mxu0 %v193
        %313 = vmatpush1.msra.mxu0 %v192
        %314 = vmatprep.subr.mxu0 %v189
        %315 = vmatpush1.msra.mxu0 %v188
        %316 = vmatprep.subr.mxu0 %v185
        %317 = vmatpush1.msra.mxu0 %v184
        %318 = vmatprep.subr.mxu0 %v181
        %319 = vmatpush1.msra.mxu0 %v180
        %320 = vmatprep.subr.mxu0 %v177
        %321 = vmatpush1.msra.mxu0 %v176
        %322 = vmatprep.subr.mxu0 0.0
        %323 = vmatpush2.msra.mxu0 0.0
        %324 = vmatprep.subr.mxu0 0.0
        %325 = vmatpush2.msra.mxu0 0.0
        %326 = vmatprep.subr.mxu0 0.0
        %327 = vmatpush2.msra.mxu0 0.0
        %328 = vmatprep.subr.mxu0 0.0
        %329 = vmatpush2.msra.mxu0 0.0
        %330 = vmatprep.subr.mxu0 0.0
        %331 = vmatpush2.msra.mxu0 0.0
        %332 = vmatprep.subr.mxu0 0.0
        %333 = vmatpush2.msra.mxu0 0.0
        %334 = vmatprep.subr.mxu0 0.0
        %335 = vmatpush2.msra.mxu0 0.0
        %336 = vmatprep.subr.mxu0 0.0
        %337 = vmatpush2.msra.mxu0 0.0
        %338 = vmatprep.subr.mxu0 0.0
        %339 = vmatpush2.msra.mxu0 0.0
        %340 = vmatprep.subr.mxu0 0.0
        %341 = vmatpush2.msra.mxu0 0.0
        %342 = vmatprep.subr.mxu0 0.0
        %343 = vmatpush2.msra.mxu0 0.0
        %344 = vmatprep.subr.mxu0 0.0
        %345 = vmatpush2.msra.mxu0 0.0
        %346 = vmatprep.subr.mxu0 0.0
        %347 = vmatpush2.msra.mxu0 0.0
        %348 = vmatprep.subr.mxu0 0.0
        %349 = vmatpush2.msra.mxu0 0.0
        %350 = vmatprep.subr.mxu0 0.0
        %351 = vmatpush2.msra.mxu0 0.0
        %352 = vmatprep.subr.mxu0 0.0
        %353 = vmatpush2.msra.mxu0 0.0
        %354 = vmatprep.mubr.f32.mxu0 0.0
        %355 = vmatmul.mubr.f32.gmra.mxu0 %v208
        %v356 = vpop.f32.mrf.mxu0
        %v357 = vadd.f32 0.0, %v356
        %v358 = vpop.f32.mrf.mxu0
        %v359 = vadd.f32 0.0, %v358
        %360 = vmatprep.mubr.f32.mxu0 0.0
        %361 = vmatmul.mubr.f32.gmra.mxu0 %v211
        %v362 = vpop.f32.mrf.mxu0
        %v363 = vadd.f32 0.0, %v362
        %v364 = vpop.f32.mrf.mxu0
        %v365 = vadd.f32 0.0, %v364
        %366 = vdwg.mxu0
        %367 = vst [vmem:[%s152] sm:$0xff] %v280
        %368 = vst [vmem:[%s152 + $0x8] sm:$0xff] %v282
        %369 = vst [vmem:[%s152 + $0x10] sm:$0xff] %v357
        %370 = vst [vmem:[%s152 + $0x18] sm:$0xff] %v359
        %371 = vst [vmem:[%s152 + $0x20] sm:$0xff] %v286
        %372 = vst [vmem:[%s152 + $0x28] sm:$0xff] %v288
        %373 = vst [vmem:[%s152 + $0x30] sm:$0xff] %v363
        %374 = vst [vmem:[%s152 + $0x38] sm:$0xff] %v365
        %s375 = sand.u32 %s72, 1
        %s376 = scalar_lea.sflag [#allocation4], %s375
        %s377 = sand.u32 %s72, 1
        %s378 = smul.addr %s377, 64
        %s379 = scalar_lea.vmem [#allocation5], %s378
        // Predicated region
        $region33: #{tpu_custom_call.1} parent=27 // pred_check
          %p380 = pneg %p82
        $region34: #{tpu_custom_call.1} parent=27 // pred_check_branch
          %382 = sbr.rel (%p380) target = $region36
        $region35: #{tpu_custom_call.1} parent=27 // pred_region
          %s383 = smul.u32 2, %s17
          %s385 = ssub.s32 1024, 1024
          %386 = vsyncadd %s376, %s385
          %s387 = smul.addr %s383, 4
          %s388 = smul.addr %s387, 128
          %s389 = scalar_lea.hbm %s2, %s388
          %s390 = sshll.u32 %s379, 4
          %s391 = int_to_ptr.vmem [resolvable:$true] %s390
          %396 = dma.vmem_to_hbm [thread:$0]  %s391, 1024, %s389, %s376, 512, 512, 32
        $region36: #{tpu_custom_call.1} parent=27 // pred_fallthru
          _
      $region28: #{tpu_custom_call.1} parent=5 // pred_fallthru
        _
      %p397 = scmp.le.s32.totalorder 2, %s12
      // Predicated region
      $region37: #{tpu_custom_call.1} parent=5 // pred_check
        %p398 = pneg %p397
      $region38: #{tpu_custom_call.1} parent=5 // pred_check_branch
        %400 = sbr.rel (%p398) target = $region40
      $region39: #{tpu_custom_call.1} parent=5 // pred_region
        %s401 = ssub.s32 %s12, 2
        // Predicated region
        $region41: #{tpu_custom_call.1} parent=39 // pred_check
          %p402 = pneg %p88
        $region42: #{tpu_custom_call.1} parent=39 // pred_check_branch
          %404 = sbr.rel (%p402) target = $region44
        $region43: #{tpu_custom_call.1} parent=39 // pred_region
          %s405 = sand.u32 %s73, 1
          %s406 = scalar_lea.sflag [#allocation4], %s405
          %s407 = sand.u32 %s73, 1
          %s408 = smul.addr %s407, 64
          %s409 = scalar_lea.vmem [#allocation5], %s408
          %410 = dma.done %s406, 1024
        $region44: #{tpu_custom_call.1} parent=39 // pred_fallthru
          _
      $region40: #{tpu_custom_call.1} parent=5 // pred_fallthru
        _
    $region6: #{tpu_custom_call.1} parent=1 // loop_footer
      %s16 = sadd.s32 1, %s12
    $region7: #{tpu_custom_call.1} parent=1 // loop_footer_branch
      %11 = sbr.rel target = $region3
    $region8: #{tpu_custom_call.1} parent=1 // loop_exit
      _
    %411 = vsyncpa [#allocation3], 1
    %s412 = scalar_lea.sflag [#allocation3], 1
    %413 = vsyncpa %s412, 1
    %414 = vsyncpa [#allocation4], 1
    %s415 = scalar_lea.sflag [#allocation4], 1
    %416 = vsyncpa %s415, 1

</llo_original>
